<compile_context>
chip_gen: v5e
topology: v5e:2x2
jax: 0.10.0
libtpu: 0.0.40
codegen_flags: <defaults>
</compile_context>

<pallas_src>
import functools
import math
import numpy as np
import jax
import jax.numpy as jnp
from jax.experimental import pallas as pl
from jax.experimental.pallas import tpu as pltpu

LANE = 128      # TPU lane width (last dim)
SUBLANE = 8     # f32 sublane count (second-to-last dim)


def _round_up(x: int, m: int) -> int:
    return ((x + m - 1) // m) * m


# --------------------------------------------------------------------------- #
# Kernel: x -> [Linear + ReLU] * num_hidden -> Linear  (all lane/sublane padded)
# --------------------------------------------------------------------------- #
def make_noise_mlp_kernel(num_layers: int):
    """num_layers = num_hidden + 1 (the final layer has no ReLU)."""

    def kernel(noise_ref, w_ref, b_ref, o_ref, x_scr):
        # noise_ref: (1, P) f32   -- real noise in lanes [0:dim_start], zeros after
        # w_ref:     (L, P, P) bf16  stacked, zero-padded weights (in, out) layout
        # b_ref:     (L, 1, P) f32   stacked, zero-padded biases
        # o_ref:     (1, P) f32   lane-dense output row
        # x_scr:     (8, P) f32   VMEM scratch holding the sublane-padded activations

        # Build the (8, P) activation block in-kernel: row 0 = noise, rows 1..7 = 0.
        # Zero rows / zero pad lanes propagate exact zeros through the padded
        # weights, so row 0 equals the un-padded math exactly.
        x_scr[...] = jnp.zeros_like(x_scr)
        x_scr[0:1, :] = noise_ref[...]
        x = x_scr[...]                                        # (8, P) f32

        for i in range(num_layers):                           # static unroll
            w = w_ref[i]                                      # (P, P) bf16
            b = b_ref[i]                                      # (1, P) f32
            # bf16 MXU matmul, f32 accumulation; epilogue (bias + ReLU) in f32.
            y = jnp.dot(x.astype(jnp.bfloat16), w,
                        preferred_element_type=jnp.float32) + b
            x = jnp.maximum(y, 0.0) if i < num_layers - 1 else y

        o_ref[...] = x[0:1, :].astype(o_ref.dtype)            # dense (1, P) store

    return kernel


# --------------------------------------------------------------------------- #
# Parameter init (PyTorch nn.Linear-style: uniform +-1/sqrt(real fan_in)),
# stored padded+stacked:  W -> (L, P, P) bf16,  b -> (L, 1, P) f32.
# --------------------------------------------------------------------------- #
def init_noise_generator_params(key, dim_out, dim_hidden, dim_start):
    real_dims = [dim_start] + list(dim_hidden) + [math.prod(dim_out)]
    # Pad every feature dim to one common lane-multiple P so weights can be
    # stacked into a single operand (one DMA). Zeros in the pad region keep
    # the padded computation exactly equal to the un-padded one.
    P = max(_round_up(d, LANE) for d in real_dims)
    L = len(real_dims) - 1

    w_list, b_list = [], []
    for i in range(L):
        fi, fo = real_dims[i], real_dims[i + 1]
        key, kw, kb = jax.random.split(key, 3)
        bound = 1.0 / math.sqrt(fi)
        w = jax.random.uniform(kw, (fi, fo), jnp.float32, -bound, bound)
        b = jax.random.uniform(kb, (fo,), jnp.float32, -bound, bound)
        # (in, out) layout so y = x @ W + b matches PyTorch's x @ W.T + b.
        w_pad = jnp.zeros((P, P), jnp.float32).at[:fi, :fo].set(w)
        b_pad = jnp.zeros((1, P), jnp.float32).at[0, :fo].set(b)
        w_list.append(w_pad.astype(jnp.bfloat16))
        b_list.append(b_pad)

    w_stack = jnp.stack(w_list)        # (L, P, P) bf16
    b_stack = jnp.stack(b_list)        # (L, 1, P) f32
    return w_stack, b_stack, tuple(real_dims)


# --------------------------------------------------------------------------- #
# Jitted forward wrapper (== module.forward(), with the noise passed in).
# --------------------------------------------------------------------------- #
@functools.partial(jax.jit, static_argnames=("dim_out", "real_dims"))
def noise_generator_forward(noise, w_stack, b_stack, dim_out, real_dims):
    """noise: (dim_start,) f32; returns array of shape dim_out (== x.view(self.dim))."""
    noise = noise.reshape(1, -1).astype(jnp.float32)          # x = x.flatten()
    dim_start = noise.shape[1]
    L, P, _ = w_stack.shape
    out_features = math.prod(dim_out)

    # Lane-pad the single noise row to (1, P); sublane fill is done in-kernel.
    noise_pad = jnp.pad(noise, ((0, 0), (0, P - dim_start)))

    # Advisory cost estimate: REAL rows/dims only (1 row, real fan-in/out).
    flops = sum(2 * real_dims[i] * real_dims[i + 1] for i in range(L))
    bytes_acc = (noise_pad.size * 4 + w_stack.size * 2 + b_stack.size * 4
                 + out_features * 4)

    vmem_spec = pl.BlockSpec(memory_space=pltpu.MemorySpace.VMEM)
    out_row = pl.pallas_call(
        make_noise_mlp_kernel(L),
        out_shape=jax.ShapeDtypeStruct((1, P), jnp.float32),
        in_specs=[vmem_spec, vmem_spec, vmem_spec],
        out_specs=vmem_spec,
        scratch_shapes=[pltpu.VMEM((SUBLANE, P), jnp.float32)],
        cost_estimate=pl.CostEstimate(
            flops=flops, bytes_accessed=bytes_acc, transcendentals=0),
    )(noise_pad, w_stack, b_stack)

    # Glue (fused under jit): drop lane padding, then x.view(self.dim).
    return out_row[0, :out_features].reshape(dim_out)


# --------------------------------------------------------------------------- #
# Plain-JAX reference on the UN-padded slices of the same (bf16) weights,
# mirroring the kernel's bf16-input / f32-accumulate matmuls.
# --------------------------------------------------------------------------- #
def reference_forward(noise, w_stack, b_stack, real_dims):
    x = noise.reshape(1, -1).astype(jnp.float32)
    L = w_stack.shape[0]
    for i in range(L):
        fi, fo = real_dims[i], real_dims[i + 1]
        w = w_stack[i, :fi, :fo]                              # bf16
        b = b_stack[i, 0, :fo]
        y = jnp.dot(x.astype(jnp.bfloat16), w,
                    preferred_element_type=jnp.float32) + b
        x = jnp.maximum(y, 0.0) if i < L - 1 else y
    return x                                                  # (1, prod(dim_out))


if __name__ == "__main__":
    # Small shapes consistent with the module's forward:
    #   dim_start=32, dim_hidden=[64], dim_out=(2, 4, 8)  (prod = 64)
    dim_start = 32
    dim_hidden = [64]
    dim_out = (2, 4, 8)

    key = jax.random.PRNGKey(0)
    key, knoise = jax.random.split(key)

    w_stack, b_stack, real_dims = init_noise_generator_params(
        key, dim_out, dim_hidden, dim_start)
    # torch.randn(self.start_dims) equivalent (plain JAX RNG, outside the kernel).
    noise = jax.random.normal(knoise, (dim_start,), dtype=jnp.float32)

    out = noise_generator_forward(noise, w_stack, b_stack, dim_out, real_dims)
    out = jax.block_until_ready(out)

    assert out.shape == tuple(dim_out), out.shape

    ref = reference_forward(noise, w_stack, b_stack, real_dims).reshape(dim_out)
    np.testing.assert_allclose(np.asarray(out), np.asarray(ref),
                               rtol=1e-3, atol=1e-3)

    print("KERNEL_OK")
</pallas_src>

<mosaic_0001>
module attributes {stable_mosaic.version = 11 : i64} {
  func.func @kernel(%arg0: memref<1x128xf32, #tpu.memory_space<vmem>>, %arg1: memref<2x128x128xbf16, #tpu.memory_space<vmem>>, %arg2: memref<2x1x128xf32, #tpu.memory_space<vmem>>, %arg3: memref<1x128xf32, #tpu.memory_space<vmem>>, %arg4: memref<8x128xf32, #tpu.memory_space<vmem>>) attributes {dimension_semantics = [], scalar_prefetch = 0 : i64, scratch_operands = 1 : i64, tpu.core_type = #tpu.core_type<tc>} {
    %cst = arith.constant 0.000000e+00 : f32
    %0 = vector.broadcast %cst : f32 to vector<8x128xf32>
    %c0 = arith.constant 0 : index
    %c0_0 = arith.constant 0 : index
    %1 = vector.load %arg4[%c0, %c0_0] : memref<8x128xf32, #tpu.memory_space<vmem>>, vector<8x128xf32>
    tpu.vector_store %arg4[%c0, %c0_0], %0 {strides = array<i32>} : memref<8x128xf32, #tpu.memory_space<vmem>>, vector<8x128xf32>,
    %c0_1 = arith.constant 0 : index
    %c0_2 = arith.constant 0 : index
    %2 = vector.load %arg0[%c0_1, %c0_2] : memref<1x128xf32, #tpu.memory_space<vmem>>, vector<1x128xf32>
    %c0_3 = arith.constant 0 : index
    %c0_4 = arith.constant 0 : index
    %3 = vector.load %arg4[%c0_3, %c0_4] : memref<8x128xf32, #tpu.memory_space<vmem>>, vector<1x128xf32>
    tpu.vector_store %arg4[%c0_3, %c0_4], %2 {strides = array<i32>} : memref<8x128xf32, #tpu.memory_space<vmem>>, vector<1x128xf32>,
    %c0_5 = arith.constant 0 : index
    %c0_6 = arith.constant 0 : index
    %4 = vector.load %arg4[%c0_5, %c0_6] : memref<8x128xf32, #tpu.memory_space<vmem>>, vector<8x128xf32>
    %c0_7 = arith.constant 0 : index
    %c0_8 = arith.constant 0 : index
    %c0_9 = arith.constant 0 : index
    %5 = vector.load %arg1[%c0_7, %c0_8, %c0_9] : memref<2x128x128xbf16, #tpu.memory_space<vmem>>, vector<1x128x128xbf16>
    %6 = vector.shape_cast %5 : vector<1x128x128xbf16> to vector<128x128xbf16>
    %c0_10 = arith.constant 0 : index
    %c0_11 = arith.constant 0 : index
    %c0_12 = arith.constant 0 : index
    %7 = vector.load %arg2[%c0_10, %c0_11, %c0_12] : memref<2x1x128xf32, #tpu.memory_space<vmem>>, vector<1x1x128xf32>
    %8 = vector.shape_cast %7 : vector<1x1x128xf32> to vector<1x128xf32>
    %9 = arith.truncf %4 : vector<8x128xf32> to vector<8x128xbf16>
    %cst_13 = arith.constant dense<0.000000e+00> : vector<8x128xf32>
    %10 = tpu.matmul %9, %6, %cst_13 {dimension_numbers = #tpu.dot_dimension_numbers<[1], [0], [0], [1], [0, 0, 1, 1], [], []>} : vector<8x128xbf16>, vector<128x128xbf16>, vector<8x128xf32> -> vector<8x128xf32>
    %11 = vector.broadcast %8 : vector<1x128xf32> to vector<8x128xf32>
    %12 = arith.addf %10, %11 : vector<8x128xf32>
    %cst_14 = arith.constant 0.000000e+00 : f32
    %13 = vector.broadcast %cst_14 : f32 to vector<8x128xf32>
    %14 = arith.maximumf %12, %13 : vector<8x128xf32>
    %c1 = arith.constant 1 : index
    %c0_15 = arith.constant 0 : index
    %c0_16 = arith.constant 0 : index
    %15 = vector.load %arg1[%c1, %c0_15, %c0_16] : memref<2x128x128xbf16, #tpu.memory_space<vmem>>, vector<1x128x128xbf16>
    %16 = vector.shape_cast %15 : vector<1x128x128xbf16> to vector<128x128xbf16>
    %c1_17 = arith.constant 1 : index
    %c0_18 = arith.constant 0 : index
    %c0_19 = arith.constant 0 : index
    %17 = vector.load %arg2[%c1_17, %c0_18, %c0_19] : memref<2x1x128xf32, #tpu.memory_space<vmem>>, vector<1x1x128xf32>
    %18 = vector.shape_cast %17 : vector<1x1x128xf32> to vector<1x128xf32>
    %19 = arith.truncf %14 : vector<8x128xf32> to vector<8x128xbf16>
    %cst_20 = arith.constant dense<0.000000e+00> : vector<8x128xf32>
    %20 = tpu.matmul %19, %16, %cst_20 {dimension_numbers = #tpu.dot_dimension_numbers<[1], [0], [0], [1], [0, 0, 1, 1], [], []>} : vector<8x128xbf16>, vector<128x128xbf16>, vector<8x128xf32> -> vector<8x128xf32>
    %21 = vector.broadcast %18 : vector<1x128xf32> to vector<8x128xf32>
    %22 = arith.addf %20, %21 : vector<8x128xf32>
    %23 = vector.extract_strided_slice %22 {offsets = [0, 0], sizes = [1, 128], strides = [1, 1]} : vector<8x128xf32> to vector<1x128xf32>
    %c0_21 = arith.constant 0 : index
    %c0_22 = arith.constant 0 : index
    %24 = vector.load %arg3[%c0_21, %c0_22] : memref<1x128xf32, #tpu.memory_space<vmem>>, vector<1x128xf32>
    tpu.vector_store %arg3[%c0_21, %c0_22], %23 {strides = array<i32>} : memref<1x128xf32, #tpu.memory_space<vmem>>, vector<1x128xf32>,
    return
  }
}

</mosaic_0001>

<llo_original>
// kernel: squeeze.1
$region0: #{squeeze.1}
  %s0 = inlined_call_operand.vmem [shape: f32[64], index: 0, kind: input, shape index: {}]
  %s1 = inlined_call_operand.hbm [shape: f32[2,4,8], index: 1, kind: output, shape index: {}]
  $region1: #{squeeze.1} parent=0
    #allocation0 [shape = 'u8[4096]{0}', space=vmem, size = 0x1000, scoped, tag = 'operand span for operand 1']
    #allocation1 [shape = 's32[1]{0}', space=sflag, size = 0x4, scoped, tag = 'scoped memory for squeeze.1']
    #allocation2 [shape = 'u8[8192]{0}', space=vmem, size = 0x2000, scoped, tag = 'scoped mem for output reshape']
    #allocation3 [shape = 'u8[4096]{0}', space=vmem, size = 0x1000, scoped, tag = 'scoped mem for input reshape']
    %2 = vsyncpa [#allocation1], 0
    %s4 = ssub.s32 2, 1
    %v5 = vld [vmem:[%s0] sm:%s4]
    %6 = vst [vmem:[#allocation3] sm:%s4] %v5
    %v7 = vld [vmem:[#allocation3] sm:$0x1]
    %vm8 = vcmask 64512
    %9 = vst.msk [vmem:[#allocation2] sm:$0x1] %vm8, %v7
    %v10 = vld [vmem:[#allocation3] sm:$0x1]
    %11 = vrot.lane.b32.xlu0 %v10, 120
    %v12 = vpop.permute.xlu0 %11
    %vm13 = vcmask 64512
    %s14 = scalar_lea.vmem [#allocation2], 1
    %15 = vst.msk [vmem:[%s14] sm:$0x1] %vm13, %v12
    %v16 = vld [vmem:[#allocation3] sm:$0x1]
    %17 = vrot.lane.b32.xlu0 %v16, 112
    %v18 = vpop.permute.xlu0 %17
    %vm19 = vcmask 64512
    %s20 = scalar_lea.vmem [#allocation2], 2
    %21 = vst.msk [vmem:[%s20] sm:$0x1] %vm19, %v18
    %v22 = vld [vmem:[#allocation3] sm:$0x1]
    %23 = vrot.lane.b32.xlu0 %v22, 104
    %v24 = vpop.permute.xlu0 %23
    %vm25 = vcmask 64512
    %s26 = scalar_lea.vmem [#allocation2], 3
    %27 = vst.msk [vmem:[%s26] sm:$0x1] %vm25, %v24
    %v28 = vld [vmem:[#allocation3] sm:$0x1]
    %29 = vrot.lane.b32.xlu0 %v28, 96
    %v30 = vpop.permute.xlu0 %29
    %vm31 = vcmask 64512
    %s32 = scalar_lea.vmem [#allocation2], 8
    %33 = vst.msk [vmem:[%s32] sm:$0x1] %vm31, %v30
    %v34 = vld [vmem:[#allocation3] sm:$0x1]
    %35 = vrot.lane.b32.xlu0 %v34, 88
    %v36 = vpop.permute.xlu0 %35
    %vm37 = vcmask 64512
    %s38 = scalar_lea.vmem [#allocation2], 9
    %39 = vst.msk [vmem:[%s38] sm:$0x1] %vm37, %v36
    %v40 = vld [vmem:[#allocation3] sm:$0x1]
    %41 = vrot.lane.b32.xlu0 %v40, 80
    %v42 = vpop.permute.xlu0 %41
    %vm43 = vcmask 64512
    %s44 = scalar_lea.vmem [#allocation2], 10
    %45 = vst.msk [vmem:[%s44] sm:$0x1] %vm43, %v42
    %v46 = vld [vmem:[#allocation3] sm:$0x1]
    %47 = vrot.lane.b32.xlu0 %v46, 72
    %v48 = vpop.permute.xlu0 %47
    %vm49 = vcmask 64512
    %s50 = scalar_lea.vmem [#allocation2], 11
    %51 = vst.msk [vmem:[%s50] sm:$0x1] %vm49, %v48
    %s53 = ssub.s32 16, 1
    %v54 = vld [vmem:[#allocation2] sm:%s53]
    %s56 = ssub.s32 16, 1
    %57 = vst [vmem:[#allocation0] sm:%s56] %v54
    %s58 = scalar_lea.vmem [#allocation2], 8
    %v59 = vld [vmem:[%s58] sm:%s53]
    %s61 = ssub.s32 16, 1
    %s62 = scalar_lea.vmem [#allocation0], 4
    %63 = vst [vmem:[%s62] sm:%s61] %v59
    %65 = vsyncadd [#allocation1], 0
    %s67 = sshll.u32 [#allocation0], 4
    %s68 = int_to_ptr.vmem [resolvable:$true] %s67
    %s69 = sshll.u32 %s1, 4
    %s70 = int_to_ptr.hbm [resolvable:$true] %s69
    %72 = dma.vmem_to_hbm [thread:$0]  %s68, 128, %s70, [#allocation1]
    %74 = dma.done [#allocation1], 128
    %75 = vsyncpa [#allocation1], 1

// kernel: noise_generator_forward.1
$region0: #{noise_generator_forward.1}
  #allocation0 [shape = 'u32[]', space=smem, size = 0x4, offset = 0x4, fixed_abs, tag = 'smem constant byte address 0x4 - core index']
  #allocation1 [shape = 'u32[72,128]{1,0:T(1,128)}', space=vmem, size = 0x9000, scoped, tag = 'internal scratch']
  #allocation2 [shape = 'f32[8,128]{1,0:T(8,128)}', space=vmem, size = 0x1000, scoped, tag = 'scratch operand']
  %s0 = inlined_call_operand.vmem [shape: f32[1,128], index: 0, kind: input, shape index: {}]
  %s1 = inlined_call_operand.hbm [shape: bf16[2,128,128], index: 1, kind: input, shape index: {}]
  %s2 = inlined_call_operand.vmem [shape: f32[2,1,128], index: 2, kind: input, shape index: {}]
  %s3 = inlined_call_operand.vmem [shape: f32[1,128], index: 3, kind: output, shape index: {}]
  %s4 = sld [smem:[#allocation0]]
  $region26: #{noise_generator_forward.1} parent=0
    _
  %s6 = ssub.s32 1, %s4
  %s7 = scalar_select 0, %s6, %s4
  $region1: #{noise_generator_forward.1} parent=0
    #allocation3 [shape = 'u8[65536]{0}', space=vmem, size = 0x10000, scoped, tag = 'input window, operand 1, single buffered']
    #allocation4 [shape = 's32[1]{0}', space=sflag, size = 0x4, scoped, tag = 'scoped memory for noise_generator_forward.1']
    %8 = vsyncpa [#allocation4], 0
    // Predicated region
    $region2: #{noise_generator_forward.1} parent=1 // pred_check
      _
    $region3: #{noise_generator_forward.1} parent=1 // pred_check_branch
      %10 = sbr.rel (0) target = $region5
    $region4: #{noise_generator_forward.1} parent=1 // pred_region
      _
    $region5: #{noise_generator_forward.1} parent=1 // pred_fallthru
      _
    // Predicated region
    $region6: #{noise_generator_forward.1} parent=1 // pred_check
      _
    $region7: #{noise_generator_forward.1} parent=1 // pred_check_branch
      %12 = sbr.rel (0) target = $region9
    $region8: #{noise_generator_forward.1} parent=1 // pred_region
      %14 = vsyncadd [#allocation4], 0
      %s15 = sshll.u32 %s1, 4
      %s16 = int_to_ptr.hbm [resolvable:$true] %s15
      %s17 = sshll.u32 [#allocation3], 4
      %s18 = int_to_ptr.vmem [resolvable:$true] %s17
      %23 = dma.hbm_to_vmem [thread:$0]  %s16, 2048, %s18, [#allocation4], 64, 64, 4
    $region9: #{noise_generator_forward.1} parent=1 // pred_fallthru
      _
    // Predicated region
    $region10: #{noise_generator_forward.1} parent=1 // pred_check
      _
    $region11: #{noise_generator_forward.1} parent=1 // pred_check_branch
      %25 = sbr.rel (0) target = $region13
    $region12: #{noise_generator_forward.1} parent=1 // pred_region
      _
    $region13: #{noise_generator_forward.1} parent=1 // pred_fallthru
      _
    // Predicated region
    $region14: #{noise_generator_forward.1} parent=1 // pred_check
      _
    $region15: #{noise_generator_forward.1} parent=1 // pred_check_branch
      %27 = sbr.rel (0) target = $region17
    $region16: #{noise_generator_forward.1} parent=1 // pred_region
      %29 = dma.done [#allocation4], 2048
    $region17: #{noise_generator_forward.1} parent=1 // pred_fallthru
      _
    %30 = vst [vmem:[#allocation2] sm:$0xff] 0.0
    %v31 = vld [vmem:[%s0] sm:$0x1]
    %32 = vst [vmem:[#allocation2] sm:$0x1] %v31
    %v33 = vld [vmem:[#allocation2] sm:$0xff]
    %v34 = vld [vmem:[#allocation3] sm:$0xf]
    %v35 = vld [vmem:[#allocation3 + $0x4] sm:$0xf]
    %v36 = vld [vmem:[#allocation3 + $0x8] sm:$0xf]
    %v37 = vld [vmem:[#allocation3 + $0xc] sm:$0xf]
    %v38 = vld [vmem:[#allocation3 + $0x10] sm:$0xf]
    %v39 = vld [vmem:[#allocation3 + $0x14] sm:$0xf]
    %v40 = vld [vmem:[#allocation3 + $0x18] sm:$0xf]
    %v41 = vld [vmem:[#allocation3 + $0x1c] sm:$0xf]
    %v42 = vld [vmem:[#allocation3 + $0x20] sm:$0xf]
    %v43 = vld [vmem:[#allocation3 + $0x24] sm:$0xf]
    %v44 = vld [vmem:[#allocation3 + $0x28] sm:$0xf]
    %v45 = vld [vmem:[#allocation3 + $0x2c] sm:$0xf]
    %v46 = vld [vmem:[#allocation3 + $0x30] sm:$0xf]
    %v47 = vld [vmem:[#allocation3 + $0x34] sm:$0xf]
    %v48 = vld [vmem:[#allocation3 + $0x38] sm:$0xf]
    %v49 = vld [vmem:[#allocation3 + $0x3c] sm:$0xf]
    %v50 = vld [vmem:[%s2] sm:$0x1]
    %v51 = vpack.c.bf16 %v33, %v33
    %v53 = vperm.slane %v50, 0
    %v71 = vunpack.c.l.b16 %v34
    %v72 = vunpack.c.l.b16 %v35
    %v73 = vunpack.c.l.b16 %v36
    %v74 = vunpack.c.l.b16 %v37
    %v75 = vunpack.c.l.b16 %v38
    %v76 = vunpack.c.l.b16 %v39
    %v77 = vunpack.c.l.b16 %v40
    %v78 = vunpack.c.l.b16 %v41
    %v79 = vunpack.c.l.b16 %v42
    %v80 = vunpack.c.l.b16 %v43
    %v81 = vunpack.c.l.b16 %v44
    %v82 = vunpack.c.l.b16 %v45
    %v83 = vunpack.c.l.b16 %v46
    %v84 = vunpack.c.l.b16 %v47
    %v85 = vunpack.c.l.b16 %v48
    %v86 = vunpack.c.l.b16 %v49
    %v87 = vpack.c.b16 %v72, %v71
    %v88 = vpack.c.b16 %v74, %v73
    %v89 = vpack.c.b16 %v76, %v75
    %v90 = vpack.c.b16 %v78, %v77
    %v91 = vpack.c.b16 %v80, %v79
    %v92 = vpack.c.b16 %v82, %v81
    %v93 = vpack.c.b16 %v84, %v83
    %v94 = vpack.c.b16 %v86, %v85
    %103 = vmatpush.bf16.msra.mxu0 %v94
    %104 = vmatpush.bf16.msra.mxu0 %v93
    %105 = vmatpush.bf16.msra.mxu0 %v92
    %106 = vmatpush.bf16.msra.mxu0 %v91
    %107 = vmatpush.bf16.msra.mxu0 %v90
    %108 = vmatpush.bf16.msra.mxu0 %v89
    %109 = vmatpush.bf16.msra.mxu0 %v88
    %110 = vmatpush.bf16.msra.mxu0 %v87
    %111 = vmatmul.bf16.gmra.mxu0 %v51
    %v112 = vpop.f32.mrf.mxu0
    %v113 = vadd.f32 %v53, %v112
    %v114 = vpop.f32.mrf.mxu0
    %115 = vdwg.mxu0
    %v116 = vmax.f32 %v113, 0.0
    %s117 = scalar_lea.vmem [#allocation3], 64
    %v118 = vld [vmem:[%s117] sm:$0xf]
    %v119 = vld [vmem:[%s117 + $0x4] sm:$0xf]
    %v120 = vld [vmem:[%s117 + $0x8] sm:$0xf]
    %v121 = vld [vmem:[%s117 + $0xc] sm:$0xf]
    %v122 = vld [vmem:[%s117 + $0x10] sm:$0xf]
    %v123 = vld [vmem:[%s117 + $0x14] sm:$0xf]
    %v124 = vld [vmem:[%s117 + $0x18] sm:$0xf]
    %v125 = vld [vmem:[%s117 + $0x1c] sm:$0xf]
    %v126 = vld [vmem:[%s117 + $0x20] sm:$0xf]
    %v127 = vld [vmem:[%s117 + $0x24] sm:$0xf]
    %v128 = vld [vmem:[%s117 + $0x28] sm:$0xf]
    %v129 = vld [vmem:[%s117 + $0x2c] sm:$0xf]
    %v130 = vld [vmem:[%s117 + $0x30] sm:$0xf]
    %v131 = vld [vmem:[%s117 + $0x34] sm:$0xf]
    %v132 = vld [vmem:[%s117 + $0x38] sm:$0xf]
    %v133 = vld [vmem:[%s117 + $0x3c] sm:$0xf]
    %s134 = scalar_lea.vmem %s2, 1
    %v135 = vld [vmem:[%s134] sm:$0x1]
    %v136 = vpack.c.bf16 %v116, %v116
    %v138 = vperm.slane %v135, 0
    %v156 = vunpack.c.l.b16 %v118
    %v157 = vunpack.c.l.b16 %v119
    %v158 = vunpack.c.l.b16 %v120
    %v159 = vunpack.c.l.b16 %v121
    %v160 = vunpack.c.l.b16 %v122
    %v161 = vunpack.c.l.b16 %v123
    %v162 = vunpack.c.l.b16 %v124
    %v163 = vunpack.c.l.b16 %v125
    %v164 = vunpack.c.l.b16 %v126
    %v165 = vunpack.c.l.b16 %v127
    %v166 = vunpack.c.l.b16 %v128
    %v167 = vunpack.c.l.b16 %v129
    %v168 = vunpack.c.l.b16 %v130
    %v169 = vunpack.c.l.b16 %v131
    %v170 = vunpack.c.l.b16 %v132
    %v171 = vunpack.c.l.b16 %v133
    %v172 = vpack.c.b16 %v157, %v156
    %v173 = vpack.c.b16 %v159, %v158
    %v174 = vpack.c.b16 %v161, %v160
    %v175 = vpack.c.b16 %v163, %v162
    %v176 = vpack.c.b16 %v165, %v164
    %v177 = vpack.c.b16 %v167, %v166
    %v178 = vpack.c.b16 %v169, %v168
    %v179 = vpack.c.b16 %v171, %v170
    %188 = vmatpush.bf16.msra.mxu0 %v179
    %189 = vmatpush.bf16.msra.mxu0 %v178
    %190 = vmatpush.bf16.msra.mxu0 %v177
    %191 = vmatpush.bf16.msra.mxu0 %v176
    %192 = vmatpush.bf16.msra.mxu0 %v175
    %193 = vmatpush.bf16.msra.mxu0 %v174
    %194 = vmatpush.bf16.msra.mxu0 %v173
    %195 = vmatpush.bf16.msra.mxu0 %v172
    %196 = vmatmul.bf16.gmra.mxu0 %v136
    %v197 = vpop.f32.mrf.mxu0
    %v198 = vadd.f32 %v138, %v197
    %v199 = vpop.f32.mrf.mxu0
    %200 = vdwg.mxu0
    %201 = vst [vmem:[%s3] sm:$0x1] %v198
    // Predicated region
    $region18: #{noise_generator_forward.1} parent=1 // pred_check
      _
    $region19: #{noise_generator_forward.1} parent=1 // pred_check_branch
      %203 = sbr.rel (0) target = $region21
    $region20: #{noise_generator_forward.1} parent=1 // pred_region
      _
    $region21: #{noise_generator_forward.1} parent=1 // pred_fallthru
      _
    // Predicated region
    $region22: #{noise_generator_forward.1} parent=1 // pred_check
      _
    $region23: #{noise_generator_forward.1} parent=1 // pred_check_branch
      %205 = sbr.rel (0) target = $region25
    $region24: #{noise_generator_forward.1} parent=1 // pred_region
      _
    $region25: #{noise_generator_forward.1} parent=1 // pred_fallthru
      _
    %206 = vsyncpa [#allocation4], 1

</llo_original>
